<compile_context>
chip_gen: v7x
topology: tpu7x:2x2x1
jax: 0.10.0
libtpu: 0.0.40
codegen_flags: <defaults>
</compile_context>

<pallas_src>
import functools

import jax
import jax.numpy as jnp
import numpy as np
from jax.experimental import pallas as pl
from jax.experimental.pallas import tpu as pltpu


# torch.clamp(x, min=e, max=1-e) with min > max applies max(x, min) then
# min(., max), so every (non-NaN) element becomes the constant 1 - e.
_XC = np.float32(1.0 - np.e)                            # ~ -1.7182818
with np.errstate(invalid="ignore"):
    _LOG_XC = float(np.log(_XC))                        # NaN (log of negative)
_LOG_1M_XC = float(np.log(np.float32(1.0) - _XC))       # log(e) ~ 1.0


def _combo_partials_kernel(x_ref, t_ref, inter_ref, sx_ref, st_ref, ce_ref,
                           *, bm, n_valid, alpha, log_xc, log_1m_xc):
    i = pl.program_id(0)

    x = x_ref[...].astype(jnp.float32)
    t = t_ref[...].astype(jnp.float32)

    # Validity mask built in-kernel (no mask stream from HBM).  Element
    # (r, l) of this tile has flat index (i*bm + r)*128 + l.
    row_ids = jax.lax.broadcasted_iota(jnp.int32, (bm, 128), 0)
    lane_ids = jax.lax.broadcasted_iota(jnp.int32, (bm, 128), 1)
    gidx = (i * bm + row_ids) * 128 + lane_ids
    valid = gidx < n_valid

    xv = jnp.where(valid, x, 0.0)
    tv = jnp.where(valid, t, 0.0)

    # "Cross-entropy" term of the reference module.  Because of the clamp bug
    # (min > max) the clamped input is the constant 1 - e, so both logs are
    # constants; log_xc is NaN -> the loss is NaN, faithful to the reference.
    ce = -(alpha * (tv * log_xc + (1.0 - alpha) * (1.0 - tv) * log_1m_xc))
    ce = jnp.where(valid, ce, 0.0)

    def fold(a):
        # (bm, 128) -> (bm//8, 8, 128) is a free split-reshape; the axis-0 sum
        # is plain VPU adds of (8, 128) vregs (no XLU cross-lane reduce).
        return jnp.sum(a.reshape(bm // 8, 8, 128), axis=0)

    inter_ref[...] = fold(xv * tv)
    sx_ref[...] = fold(xv)
    st_ref[...] = fold(tv)
    ce_ref[...] = fold(ce)


def combo_loss(inputs, targets, smooth=1.0, alpha=0.5, ce_ratio=0.5,
               block_rows=4096):
    """Pallas equivalent of ComboLoss.forward. Returns a scalar float32."""
    x = jnp.reshape(inputs, (-1,))
    t = jnp.reshape(targets, (-1,))
    n = int(x.shape[0])

    lanes = 128
    min_rows = 8
    # Pad only the tail to a multiple of 8*128 (no copy at all if n already
    # is one).  Pad values are irrelevant — masked in-kernel.
    pad = (-n) % (min_rows * lanes)
    if pad:
        x = jnp.pad(x, (0, pad))
        t = jnp.pad(t, (0, pad))
    rows = (n + pad) // lanes                      # multiple of 8

    bm = min(block_rows, rows)                     # multiple of 8 either way
    total_blocks = pl.cdiv(rows, bm)               # last block may be partial

    x2 = x.reshape(rows, lanes)
    t2 = t.reshape(rows, lanes)

    kernel = functools.partial(
        _combo_partials_kernel,
        bm=bm, n_valid=n, alpha=float(alpha),
        log_xc=_LOG_XC, log_1m_xc=_LOG_1M_XC)

    in_spec = pl.BlockSpec((bm, lanes), lambda i: (i, 0))
    out_spec = pl.BlockSpec((None, 8, lanes), lambda i: (i, 0, 0))
    part_shape = jax.ShapeDtypeStruct((total_blocks, 8, lanes), jnp.float32)

    p_inter, p_sx, p_st, p_ce = pl.pallas_call(
        kernel,
        out_shape=(part_shape, part_shape, part_shape, part_shape),
        grid_spec=pltpu.PrefetchScalarGridSpec(
            num_scalar_prefetch=0,
            grid=(total_blocks,),
            in_specs=[in_spec, in_spec],
            out_specs=[out_spec, out_spec, out_spec, out_spec],
        ),
        compiler_params=pltpu.CompilerParams(
            dimension_semantics=("parallel",)),
    )(x2, t2)

    # Combine the tiny per-block partials (also merges per-core partials on
    # v7x) and apply the scalar epilogue of the reference formula.
    intersection = jnp.sum(p_inter)
    sum_x = jnp.sum(p_sx)
    sum_t = jnp.sum(p_st)
    ce_sum = jnp.sum(p_ce)

    dice = (2.0 * intersection + smooth) / (sum_x + sum_t + smooth)
    weighted_ce = ce_sum / n
    return ce_ratio * weighted_ce - (1.0 - ce_ratio) * dice


if __name__ == "__main__":
    key = jax.random.PRNGKey(0)
    k_in, k_tg = jax.random.split(key)
    # Segmentation-style inputs: probabilities in [0, 1), binary targets.
    x = jax.random.uniform(k_in, (2, 4, 16, 16), dtype=jnp.float32)
    tgt = (jax.random.uniform(k_tg, (2, 4, 16, 16)) > 0.5).astype(jnp.float32)

    loss = combo_loss(x, tgt)
    jax.block_until_ready(loss)
    # The value is NaN by construction (faithful to the reference clamp bug);
    # the kernel itself ran to completion.
    print("KERNEL_OK")
</pallas_src>

<mosaic_0001>
module attributes {stable_mosaic.version = 11 : i64} {
  func.func @_combo_partials_kernel(%arg0: i32, %arg1: memref<16x128xf32, #tpu.memory_space<vmem>>, %arg2: memref<16x128xf32, #tpu.memory_space<vmem>>, %arg3: memref<1x8x128xf32, #tpu.memory_space<vmem>>, %arg4: memref<1x8x128xf32, #tpu.memory_space<vmem>>, %arg5: memref<1x8x128xf32, #tpu.memory_space<vmem>>, %arg6: memref<1x8x128xf32, #tpu.memory_space<vmem>>) attributes {dimension_semantics = [#tpu.dimension_semantics<parallel>], iteration_bounds = array<i64: 1>, scalar_prefetch = 0 : i64, scratch_operands = 0 : i64, tpu.core_type = #tpu.core_type<tc>, window_params = [{transform_indices = @transform_0, window_bounds = array<i64: 16, 128>}, {transform_indices = @transform_1, window_bounds = array<i64: 16, 128>}, {transform_indices = @transform_2, window_bounds = array<i64: 1, 8, 128>}, {transform_indices = @transform_3, window_bounds = array<i64: 1, 8, 128>}, {transform_indices = @transform_4, window_bounds = array<i64: 1, 8, 128>}, {transform_indices = @transform_5, window_bounds = array<i64: 1, 8, 128>}]} {
    %c0 = arith.constant 0 : index
    %c0_0 = arith.constant 0 : index
    %0 = vector.load %arg1[%c0, %c0_0] : memref<16x128xf32, #tpu.memory_space<vmem>>, vector<16x128xf32>
    %c0_1 = arith.constant 0 : index
    %c0_2 = arith.constant 0 : index
    %1 = vector.load %arg2[%c0_1, %c0_2] : memref<16x128xf32, #tpu.memory_space<vmem>>, vector<16x128xf32>
    %2 = tpu.iota {dimensions = array<i32: 0>} : vector<16x128xi32>
    %3 = tpu.iota {dimensions = array<i32: 1>} : vector<16x128xi32>
    %c16_i32 = arith.constant 16 : i32
    %4 = arith.muli %arg0, %c16_i32 : i32
    %5 = vector.broadcast %4 : i32 to vector<16x128xi32>
    %6 = arith.addi %5, %2 : vector<16x128xi32>
    %c128_i32 = arith.constant 128 : i32
    %7 = vector.broadcast %c128_i32 : i32 to vector<16x128xi32>
    %8 = arith.muli %6, %7 : vector<16x128xi32>
    %9 = arith.addi %8, %3 : vector<16x128xi32>
    %c2048_i32 = arith.constant 2048 : i32
    %10 = vector.broadcast %c2048_i32 : i32 to vector<16x128xi32>
    %11 = arith.cmpi slt, %9, %10 : vector<16x128xi32>
    %cst = arith.constant 0.000000e+00 : f32
    %12 = vector.broadcast %cst : f32 to vector<16x128xf32>
    %13 = arith.select %11, %0, %12 : vector<16x128xi1>, vector<16x128xf32>
    %cst_3 = arith.constant 0.000000e+00 : f32
    %14 = vector.broadcast %cst_3 : f32 to vector<16x128xf32>
    %15 = arith.select %11, %1, %14 : vector<16x128xi1>, vector<16x128xf32>
    %cst_4 = arith.constant 0xFFC00000 : f32
    %16 = vector.broadcast %cst_4 : f32 to vector<16x128xf32>
    %17 = arith.mulf %15, %16 : vector<16x128xf32>
    %cst_5 = arith.constant 1.000000e+00 : f32
    %18 = vector.broadcast %cst_5 : f32 to vector<16x128xf32>
    %19 = arith.subf %18, %15 : vector<16x128xf32>
    %cst_6 = arith.constant 5.000000e-01 : f32
    %20 = vector.broadcast %cst_6 : f32 to vector<16x128xf32>
    %21 = arith.mulf %20, %19 : vector<16x128xf32>
    %cst_7 = arith.constant 1.000000e+00 : f32
    %22 = vector.broadcast %cst_7 : f32 to vector<16x128xf32>
    %23 = arith.mulf %21, %22 : vector<16x128xf32>
    %24 = arith.addf %17, %23 : vector<16x128xf32>
    %cst_8 = arith.constant 5.000000e-01 : f32
    %25 = vector.broadcast %cst_8 : f32 to vector<16x128xf32>
    %26 = arith.mulf %25, %24 : vector<16x128xf32>
    %cst_9 = arith.constant 0.000000e+00 : f32
    %27 = vector.broadcast %cst_9 : f32 to vector<16x128xf32>
    %28 = arith.subf %27, %26 : vector<16x128xf32>
    %cst_10 = arith.constant 0.000000e+00 : f32
    %29 = vector.broadcast %cst_10 : f32 to vector<16x128xf32>
    %30 = arith.select %11, %28, %29 : vector<16x128xi1>, vector<16x128xf32>
    %31 = arith.mulf %13, %15 : vector<16x128xf32>
    %32 = vector.shape_cast %31 : vector<16x128xf32> to vector<2x8x128xf32>
    %cst_11 = arith.constant dense<0.000000e+00> : vector<8x128xf32>
    %33 = vector.multi_reduction <add>, %32, %cst_11 [0] : vector<2x8x128xf32> to vector<8x128xf32>
    %c0_12 = arith.constant 0 : index
    %c0_13 = arith.constant 0 : index
    %c0_14 = arith.constant 0 : index
    %34 = vector.load %arg3[%c0_12, %c0_13, %c0_14] : memref<1x8x128xf32, #tpu.memory_space<vmem>>, vector<1x8x128xf32>
    %35 = vector.shape_cast %34 : vector<1x8x128xf32> to vector<8x128xf32>
    %36 = vector.shape_cast %33 : vector<8x128xf32> to vector<1x8x128xf32>
    tpu.vector_store %arg3[%c0_12, %c0_13, %c0_14], %36 {strides = array<i32>} : memref<1x8x128xf32, #tpu.memory_space<vmem>>, vector<1x8x128xf32>,
    %37 = vector.shape_cast %13 : vector<16x128xf32> to vector<2x8x128xf32>
    %cst_15 = arith.constant dense<0.000000e+00> : vector<8x128xf32>
    %38 = vector.multi_reduction <add>, %37, %cst_15 [0] : vector<2x8x128xf32> to vector<8x128xf32>
    %c0_16 = arith.constant 0 : index
    %c0_17 = arith.constant 0 : index
    %c0_18 = arith.constant 0 : index
    %39 = vector.load %arg4[%c0_16, %c0_17, %c0_18] : memref<1x8x128xf32, #tpu.memory_space<vmem>>, vector<1x8x128xf32>
    %40 = vector.shape_cast %39 : vector<1x8x128xf32> to vector<8x128xf32>
    %41 = vector.shape_cast %38 : vector<8x128xf32> to vector<1x8x128xf32>
    tpu.vector_store %arg4[%c0_16, %c0_17, %c0_18], %41 {strides = array<i32>} : memref<1x8x128xf32, #tpu.memory_space<vmem>>, vector<1x8x128xf32>,
    %42 = vector.shape_cast %15 : vector<16x128xf32> to vector<2x8x128xf32>
    %cst_19 = arith.constant dense<0.000000e+00> : vector<8x128xf32>
    %43 = vector.multi_reduction <add>, %42, %cst_19 [0] : vector<2x8x128xf32> to vector<8x128xf32>
    %c0_20 = arith.constant 0 : index
    %c0_21 = arith.constant 0 : index
    %c0_22 = arith.constant 0 : index
    %44 = vector.load %arg5[%c0_20, %c0_21, %c0_22] : memref<1x8x128xf32, #tpu.memory_space<vmem>>, vector<1x8x128xf32>
    %45 = vector.shape_cast %44 : vector<1x8x128xf32> to vector<8x128xf32>
    %46 = vector.shape_cast %43 : vector<8x128xf32> to vector<1x8x128xf32>
    tpu.vector_store %arg5[%c0_20, %c0_21, %c0_22], %46 {strides = array<i32>} : memref<1x8x128xf32, #tpu.memory_space<vmem>>, vector<1x8x128xf32>,
    %47 = vector.shape_cast %30 : vector<16x128xf32> to vector<2x8x128xf32>
    %cst_23 = arith.constant dense<0.000000e+00> : vector<8x128xf32>
    %48 = vector.multi_reduction <add>, %47, %cst_23 [0] : vector<2x8x128xf32> to vector<8x128xf32>
    %c0_24 = arith.constant 0 : index
    %c0_25 = arith.constant 0 : index
    %c0_26 = arith.constant 0 : index
    %49 = vector.load %arg6[%c0_24, %c0_25, %c0_26] : memref<1x8x128xf32, #tpu.memory_space<vmem>>, vector<1x8x128xf32>
    %50 = vector.shape_cast %49 : vector<1x8x128xf32> to vector<8x128xf32>
    %51 = vector.shape_cast %48 : vector<8x128xf32> to vector<1x8x128xf32>
    tpu.vector_store %arg6[%c0_24, %c0_25, %c0_26], %51 {strides = array<i32>} : memref<1x8x128xf32, #tpu.memory_space<vmem>>, vector<1x8x128xf32>,
    return
  }
  func.func @transform_0(%arg0: i32) -> (i32, i32) {
    %c0_i32 = arith.constant 0 : i32
    %c0_i32_0 = arith.constant 0 : i32
    return %arg0, %c0_i32 : i32, i32
  }
  func.func @transform_1(%arg0: i32) -> (i32, i32) {
    %c0_i32 = arith.constant 0 : i32
    %c0_i32_0 = arith.constant 0 : i32
    return %arg0, %c0_i32 : i32, i32
  }
  func.func @transform_2(%arg0: i32) -> (i32, i32, i32) {
    %c0_i32 = arith.constant 0 : i32
    %c0_i32_0 = arith.constant 0 : i32
    %c0_i32_1 = arith.constant 0 : i32
    return %arg0, %c0_i32, %c0_i32_0 : i32, i32, i32
  }
  func.func @transform_3(%arg0: i32) -> (i32, i32, i32) {
    %c0_i32 = arith.constant 0 : i32
    %c0_i32_0 = arith.constant 0 : i32
    %c0_i32_1 = arith.constant 0 : i32
    return %arg0, %c0_i32, %c0_i32_0 : i32, i32, i32
  }
  func.func @transform_4(%arg0: i32) -> (i32, i32, i32) {
    %c0_i32 = arith.constant 0 : i32
    %c0_i32_0 = arith.constant 0 : i32
    %c0_i32_1 = arith.constant 0 : i32
    return %arg0, %c0_i32, %c0_i32_0 : i32, i32, i32
  }
  func.func @transform_5(%arg0: i32) -> (i32, i32, i32) {
    %c0_i32 = arith.constant 0 : i32
    %c0_i32_0 = arith.constant 0 : i32
    %c0_i32_1 = arith.constant 0 : i32
    return %arg0, %c0_i32, %c0_i32_0 : i32, i32, i32
  }
}

</mosaic_0001>

<llo_original>
// kernel: tpu_custom_call.1
$region0: #{tpu_custom_call.1}
  #allocation0 [shape = 'u32[]', space=smem, size = 0x4, offset = 0x4, fixed_abs, tag = 'smem constant byte address 0x4 - core index']
  #allocation1 [shape = 'u32[144,128]{1,0:T(1,128)}', space=vmem, size = 0x12000, scoped, tag = 'internal scratch']
  %s0 = inlined_call_operand.hbm [shape: f32[16,128], index: 0, kind: input, shape index: {}]
  %s1 = inlined_call_operand.hbm [shape: f32[16,128], index: 1, kind: input, shape index: {}]
  %s2 = inlined_call_operand.hbm [shape: f32[1,8,128], index: 2, kind: output, shape index: {0}]
  %s3 = inlined_call_operand.hbm [shape: f32[1,8,128], index: 3, kind: output, shape index: {1}]
  %s4 = inlined_call_operand.hbm [shape: f32[1,8,128], index: 4, kind: output, shape index: {2}]
  %s5 = inlined_call_operand.hbm [shape: f32[1,8,128], index: 5, kind: output, shape index: {3}]
  %6 = xla_tuple %s2, %s3, %s4, %s5
  %s7 = sld [smem:[#allocation0]]
  $region50: #{tpu_custom_call.1} parent=0
    _
  %s9 = ssub.s32 1, %s7
  %s10 = scalar_select 0, %s9, %s7
  $region1: #{tpu_custom_call.1} parent=0
    #allocation2 [shape = 'u8[8192]{0}', space=vmem, size = 0x2000, scoped, tag = 'input window, operand 0, single buffered']
    #allocation3 [shape = 's32[1]{0}', space=sflag, size = 0x4, scoped, tag = 'scoped memory for tpu_custom_call.1']
    #allocation4 [shape = 's32[1]{0}', space=sflag, size = 0x4, scoped, tag = 'scoped memory for tpu_custom_call.1']
    #allocation5 [shape = 'u8[8192]{0}', space=vmem, size = 0x2000, scoped, tag = 'input window, operand 1, single buffered']
    #allocation6 [shape = 's32[1]{0}', space=sflag, size = 0x4, scoped, tag = 'scoped memory for tpu_custom_call.1']
    #allocation7 [shape = 'u8[4096]{0}', space=vmem, size = 0x1000, scoped, tag = 'output window, operand 0, single buffered']
    #allocation8 [shape = 'u8[4096]{0}', space=vmem, size = 0x1000, scoped, tag = 'output window, operand 1, single buffered']
    #allocation9 [shape = 's32[1]{0}', space=sflag, size = 0x4, scoped, tag = 'scoped memory for tpu_custom_call.1']
    #allocation10 [shape = 'u8[4096]{0}', space=vmem, size = 0x1000, scoped, tag = 'output window, operand 2, single buffered']
    #allocation11 [shape = 'u8[4096]{0}', space=vmem, size = 0x1000, scoped, tag = 'output window, operand 3, single buffered']
    #allocation12 [shape = 's32[1]{0}', space=sflag, size = 0x4, scoped, tag = 'scoped memory for tpu_custom_call.1']
    %11 = vsyncpa [#allocation3], 0
    %12 = vsyncpa [#allocation6], 0
    %13 = vsyncpa [#allocation4], 0
    %14 = vsyncpa [#allocation9], 0
    %15 = vsyncpa [#allocation12], 0
    // Predicated region
    $region2: #{tpu_custom_call.1} parent=1 // pred_check
      _
    $region3: #{tpu_custom_call.1} parent=1 // pred_check_branch
      %17 = sbr.rel (0) target = $region5
    $region4: #{tpu_custom_call.1} parent=1 // pred_region
      %s19 = ssub.s32 256, 256
      %20 = vsyncadd [#allocation3], %s19
      %s21 = sshll.u32 [#allocation2], 4
      %s22 = int_to_ptr.vmem [resolvable:$true] %s21
      %27 = dma.hbm_to_vmem [thread:$0]  %s0, 256, %s22, [#allocation3], 128, 128, 8
    $region5: #{tpu_custom_call.1} parent=1 // pred_fallthru
      _
    // Predicated region
    $region6: #{tpu_custom_call.1} parent=1 // pred_check
      _
    $region7: #{tpu_custom_call.1} parent=1 // pred_check_branch
      %29 = sbr.rel (0) target = $region9
    $region8: #{tpu_custom_call.1} parent=1 // pred_region
      %s31 = ssub.s32 256, 256
      %32 = vsyncadd [#allocation6], %s31
      %s33 = sshll.u32 [#allocation5], 4
      %s34 = int_to_ptr.vmem [resolvable:$true] %s33
      %39 = dma.hbm_to_vmem [thread:$0]  %s1, 256, %s34, [#allocation6], 128, 128, 8
    $region9: #{tpu_custom_call.1} parent=1 // pred_fallthru
      _
    // Predicated region
    $region10: #{tpu_custom_call.1} parent=1 // pred_check
      _
    $region11: #{tpu_custom_call.1} parent=1 // pred_check_branch
      %41 = sbr.rel (0) target = $region13
    $region12: #{tpu_custom_call.1} parent=1 // pred_region
      %42 = dma.done [#allocation3], 256
    $region13: #{tpu_custom_call.1} parent=1 // pred_fallthru
      _
    // Predicated region
    $region14: #{tpu_custom_call.1} parent=1 // pred_check
      _
    $region15: #{tpu_custom_call.1} parent=1 // pred_check_branch
      %44 = sbr.rel (0) target = $region17
    $region16: #{tpu_custom_call.1} parent=1 // pred_region
      %45 = dma.done [#allocation6], 256
    $region17: #{tpu_custom_call.1} parent=1 // pred_fallthru
      _
    %v46 = vld [vmem:[#allocation2] sm:$0xff]
    %v47 = vld [vmem:[#allocation2 + $0x8] sm:$0xff]
    %v48 = vld [vmem:[#allocation5] sm:$0xff]
    %v49 = vld [vmem:[#allocation5 + $0x8] sm:$0xff]
    %v50 = vlaneseq
    %v51 = vshrl.u32 %v50, 7
    %v52 = vadd.s32 %v51, 8
    %v53 = vlaneseq
    %v54 = vand.u32 %v53, 127
    %s55 = smul.u32 0, 16
    %v56 = vstv %s55
    %v57 = vadd.s32 %v56, %v51
    %v58 = vadd.s32 %v56, %v52
    %v59 = vmul.u32 %v57, 128
    %v60 = vmul.u32 %v58, 128
    %v61 = vadd.s32 %v59, %v54
    %v62 = vadd.s32 %v60, %v54
    %vm63 = vcmp.lt.s32.totalorder %v61, 2048
    %vm64 = vcmp.lt.s32.totalorder %v62, 2048
    %v65 = vsel %vm63, %v46, 0.0
    %v66 = vsel %vm64, %v47, 0.0
    %v67 = vsel %vm63, %v48, 0.0
    %v68 = vsel %vm64, %v49, 0.0
    %v69 = vmul.f32 %v67, nan
    %v70 = vmul.f32 %v68, nan
    %v71 = vsub.f32 1.0, %v67
    %v72 = vsub.f32 1.0, %v68
    %v73 = vmul.f32 %v71, 0.5
    %v74 = vmul.f32 %v72, 0.5
    %v75 = vadd.f32 %v69, %v73
    %v76 = vadd.f32 %v70, %v74
    %v77 = vmul.f32 %v75, 0.5
    %v78 = vmul.f32 %v76, 0.5
    %v79 = vsub.f32 0.0, %v77
    %v80 = vsub.f32 0.0, %v78
    %v81 = vsel %vm63, %v79, 0.0
    %v82 = vsel %vm64, %v80, 0.0
    %v83 = vmul.f32 %v65, %v67
    %v84 = vmul.f32 %v66, %v68
    %v85 = vadd.f32 %v83, %v84
    %86 = vst [vmem:[#allocation7] sm:$0xff] %v85
    %v87 = vadd.f32 %v65, %v66
    %88 = vst [vmem:[#allocation8] sm:$0xff] %v87
    %v89 = vadd.f32 %v67, %v68
    %90 = vst [vmem:[#allocation10] sm:$0xff] %v89
    %v91 = vadd.f32 %v81, %v82
    %92 = vst [vmem:[#allocation11] sm:$0xff] %v91
    // Predicated region
    $region18: #{tpu_custom_call.1} parent=1 // pred_check
      _
    $region19: #{tpu_custom_call.1} parent=1 // pred_check_branch
      %94 = sbr.rel (0) target = $region21
    $region20: #{tpu_custom_call.1} parent=1 // pred_region
      %s96 = ssub.s32 128, 128
      %97 = vsyncadd [#allocation4], %s96
      %s99 = sshll.u32 [#allocation7], 4
      %s100 = int_to_ptr.vmem [resolvable:$true] %s99
      %102 = dma.vmem_to_hbm [thread:$0]  %s100, 128, %s2, [#allocation4]
    $region21: #{tpu_custom_call.1} parent=1 // pred_fallthru
      _
    // Predicated region
    $region22: #{tpu_custom_call.1} parent=1 // pred_check
      _
    $region23: #{tpu_custom_call.1} parent=1 // pred_check_branch
      %104 = sbr.rel (0) target = $region25
    $region24: #{tpu_custom_call.1} parent=1 // pred_region
      %s106 = ssub.s32 128, 128
      %107 = vsyncadd [#allocation9], %s106
      %s109 = sshll.u32 [#allocation8], 4
      %s110 = int_to_ptr.vmem [resolvable:$true] %s109
      %112 = dma.vmem_to_hbm [thread:$0]  %s110, 128, %s3, [#allocation9]
    $region25: #{tpu_custom_call.1} parent=1 // pred_fallthru
      _
    // Predicated region
    $region26: #{tpu_custom_call.1} parent=1 // pred_check
      _
    $region27: #{tpu_custom_call.1} parent=1 // pred_check_branch
      %114 = sbr.rel (0) target = $region29
    $region28: #{tpu_custom_call.1} parent=1 // pred_region
      %s116 = ssub.s32 128, 128
      %117 = vsyncadd [#allocation9], %s116
      %s119 = sshll.u32 [#allocation10], 4
      %s120 = int_to_ptr.vmem [resolvable:$true] %s119
      %122 = dma.vmem_to_hbm [thread:$0]  %s120, 128, %s4, [#allocation9]
    $region29: #{tpu_custom_call.1} parent=1 // pred_fallthru
      _
    // Predicated region
    $region30: #{tpu_custom_call.1} parent=1 // pred_check
      _
    $region31: #{tpu_custom_call.1} parent=1 // pred_check_branch
      %124 = sbr.rel (0) target = $region33
    $region32: #{tpu_custom_call.1} parent=1 // pred_region
      %s126 = ssub.s32 128, 128
      %127 = vsyncadd [#allocation12], %s126
      %s129 = sshll.u32 [#allocation11], 4
      %s130 = int_to_ptr.vmem [resolvable:$true] %s129
      %132 = dma.vmem_to_hbm [thread:$0]  %s130, 128, %s5, [#allocation12]
    $region33: #{tpu_custom_call.1} parent=1 // pred_fallthru
      _
    // Predicated region
    $region34: #{tpu_custom_call.1} parent=1 // pred_check
      _
    $region35: #{tpu_custom_call.1} parent=1 // pred_check_branch
      %134 = sbr.rel (0) target = $region37
    $region36: #{tpu_custom_call.1} parent=1 // pred_region
      %135 = dma.done [#allocation4], 128
    $region37: #{tpu_custom_call.1} parent=1 // pred_fallthru
      _
    // Predicated region
    $region38: #{tpu_custom_call.1} parent=1 // pred_check
      _
    $region39: #{tpu_custom_call.1} parent=1 // pred_check_branch
      %137 = sbr.rel (0) target = $region41
    $region40: #{tpu_custom_call.1} parent=1 // pred_region
      %138 = dma.done [#allocation9], 128
    $region41: #{tpu_custom_call.1} parent=1 // pred_fallthru
      _
    // Predicated region
    $region42: #{tpu_custom_call.1} parent=1 // pred_check
      _
    $region43: #{tpu_custom_call.1} parent=1 // pred_check_branch
      %140 = sbr.rel (0) target = $region45
    $region44: #{tpu_custom_call.1} parent=1 // pred_region
      %141 = dma.done [#allocation9], 128
    $region45: #{tpu_custom_call.1} parent=1 // pred_fallthru
      _
    // Predicated region
    $region46: #{tpu_custom_call.1} parent=1 // pred_check
      _
    $region47: #{tpu_custom_call.1} parent=1 // pred_check_branch
      %143 = sbr.rel (0) target = $region49
    $region48: #{tpu_custom_call.1} parent=1 // pred_region
      %144 = dma.done [#allocation12], 128
    $region49: #{tpu_custom_call.1} parent=1 // pred_fallthru
      _
    %145 = vsyncpa [#allocation3], 1
    %146 = vsyncpa [#allocation6], 1
    %147 = vsyncpa [#allocation4], 1
    %148 = vsyncpa [#allocation9], 1
    %149 = vsyncpa [#allocation12], 1

</llo_original>
